<compile_context>
chip_gen: v7x
topology: tpu7x:2x2x1
jax: 0.10.0
libtpu: 0.0.40
codegen_flags: <defaults>
</compile_context>

<pallas_src>
import functools

import jax
import jax.numpy as jnp
from jax.experimental import pallas as pl
from jax.experimental.pallas import tpu as pltpu


def _patch_embed_kernel(p_ref, w_ref, b_ref, g_ref, beta_ref, o_ref):
    # p_ref: (1, K, TL) patch features (transposed), w_ref: (E, K),
    # b/g/beta: (E, 1), o_ref: (1, E, TL)
    p = p_ref[0].astype(jnp.float32)                       # (K, TL)
    w = w_ref[...].astype(jnp.float32)                     # (E, K)
    # per-patch linear projection (== Conv with kernel_size == stride == patch)
    y = jnp.dot(w, p, preferred_element_type=jnp.float32)  # (E, TL)
    y = y + b_ref[...].astype(jnp.float32)

    # LayerNorm over embed_dim E (PyTorch nn.LayerNorm: biased var, eps=1e-5).
    # E is the sublane axis in this transposed layout; single-pass statistics
    # (var = E[y^2] - mean^2) save one full VPU/VMEM sweep over the f32 temp.
    e_dim = y.shape[0]
    inv_e = 1.0 / e_dim
    s1 = jnp.sum(y, axis=0, keepdims=True)                 # (1, TL)
    s2 = jnp.sum(y * y, axis=0, keepdims=True)             # (1, TL)
    mean = s1 * inv_e
    var = jnp.maximum(s2 * inv_e - mean * mean, 0.0)
    inv = jax.lax.rsqrt(var + 1e-5)
    out = (y - mean) * inv * g_ref[...].astype(jnp.float32) \
        + beta_ref[...].astype(jnp.float32)
    o_ref[0] = out.astype(o_ref.dtype)


def _fused_proj_norm(patches_t, w_ek, bias, gamma, beta, *, out_dtype,
                     max_tile_tokens=8192):
    """patches_t: (B, K, L), w_ek: (E, K), bias/gamma/beta: (E,) -> (B, E, L)."""
    B, K, L = patches_t.shape
    E = w_ek.shape[0]
    assert max_tile_tokens % 128 == 0

    # Token-tile selection: as large as possible (amortizes the ~0.35us fixed
    # per-grid-step overhead), lanes either a multiple of 128 or the full
    # (exact) token axis.  No wrapper-side pad/slice: the grid is non-dividing
    # and Pallas masks the boundary tile.
    tile_l = min(max_tile_tokens, ((L + 127) // 128) * 128)
    if tile_l >= L:
        tile_l = L  # single full-extent tile (full-dim block is always legal)
    # Keep >= 2 grid steps when B == 1 so both v7x TensorCores get work.
    if B == 1 and L > 256 and pl.cdiv(L, tile_l) < 2:
        half = ((pl.cdiv(L, 2) + 127) // 128) * 128
        tile_l = half if half < L else L

    bias2 = bias.reshape(E, 1)
    gamma2 = gamma.reshape(E, 1)
    beta2 = beta.reshape(E, 1)

    grid = (B, pl.cdiv(L, tile_l))
    out = pl.pallas_call(
        _patch_embed_kernel,
        out_shape=jax.ShapeDtypeStruct((B, E, L), out_dtype),
        grid_spec=pl.GridSpec(
            grid=grid,
            in_specs=[
                pl.BlockSpec((1, K, tile_l), lambda b, l: (b, 0, l)),  # patches^T
                pl.BlockSpec((E, K), lambda b, l: (0, 0)),             # proj weight
                pl.BlockSpec((E, 1), lambda b, l: (0, 0)),             # conv bias
                pl.BlockSpec((E, 1), lambda b, l: (0, 0)),             # LN gamma
                pl.BlockSpec((E, 1), lambda b, l: (0, 0)),             # LN beta
            ],
            out_specs=pl.BlockSpec((1, E, tile_l), lambda b, l: (b, 0, l)),
        ),
        compiler_params=pltpu.CompilerParams(
            dimension_semantics=("parallel", "parallel"),
            vmem_limit_bytes=32 * 1024 * 1024,
        ),
    )(patches_t, w_ek, bias2, gamma2, beta2)
    return out


def patch_embed_forward(x, params, patch_size, max_tile_tokens=8192):
    """JAX/Pallas equivalent of PatchEmbed.forward (spatial_dims=3).

    x: (B, C, D, H, W) float32  (PyTorch NCDHW convention)
    returns: (B, E, D_p, H_p, W_p) in x.dtype
    """
    pd, ph, pw = patch_size
    B, C, D, H, W = x.shape

    # pad trailing spatial dims so each is divisible by its patch size
    pad_d = (-D) % pd
    pad_h = (-H) % ph
    pad_w = (-W) % pw
    if pad_d or pad_h or pad_w:
        x = jnp.pad(x, ((0, 0), (0, 0), (0, pad_d), (0, pad_h), (0, pad_w)))
    D2, H2, W2 = D + pad_d, H + pad_h, W + pad_w
    Dp, Hp, Wp = D2 // pd, H2 // ph, W2 // pw

    # extract non-overlapping patches, transposed (K, tokens) so the kernel's
    # token axis lands on the 128-wide lane axis:
    #   (B, C, Dp, pd, Hp, ph, Wp, pw) -> (B, C, pd, ph, pw, Dp, Hp, Wp)
    # feature order (C, pd, ph, pw) matches PyTorch conv weight (E, C, kd, kh, kw);
    # token order (Dp, Hp, Wp) matches the NCDHW output flattening.
    # TODO(synk): this transpose is an extra XLA HBM pass; see module docstring.
    xp = x.reshape(B, C, Dp, pd, Hp, ph, Wp, pw)
    xp = xp.transpose(0, 1, 3, 5, 7, 2, 4, 6)
    patches_t = xp.reshape(B, C * pd * ph * pw, Dp * Hp * Wp)  # (B, K, L)

    E = params["w"].shape[0]
    w_ek = params["w"].reshape(E, C * pd * ph * pw)             # (E, K)

    out_tokens = _fused_proj_norm(
        patches_t, w_ek, params["b"], params["gamma"], params["beta"],
        out_dtype=x.dtype, max_tile_tokens=max_tile_tokens,
    )  # (B, E, L) already in NCDHW token order

    return out_tokens.reshape(B, E, Dp, Hp, Wp)


def _reference(x, params, patch_size):
    """Pure-JAX reference (pad + conv via lax.conv + layernorm) for validation."""
    pd, ph, pw = patch_size
    B, C, D, H, W = x.shape
    x = jnp.pad(x, ((0, 0), (0, 0),
                    (0, (-D) % pd), (0, (-H) % ph), (0, (-W) % pw)))
    y = jax.lax.conv_general_dilated(
        x, params["w"], window_strides=(pd, ph, pw), padding="VALID",
        dimension_numbers=("NCDHW", "OIDHW", "NCDHW"),
    ) + params["b"].reshape(1, -1, 1, 1, 1)
    B, E, Dp, Hp, Wp = y.shape
    t = y.reshape(B, E, -1).transpose(0, 2, 1)  # (B, L, E)
    mean = jnp.mean(t, axis=-1, keepdims=True)
    var = jnp.mean((t - mean) ** 2, axis=-1, keepdims=True)
    t = (t - mean) * jax.lax.rsqrt(var + 1e-5)
    t = t * params["gamma"] + params["beta"]
    return t.transpose(0, 2, 1).reshape(B, E, Dp, Hp, Wp)


if __name__ == "__main__":
    # PatchEmbed defaults: patch_size=2, in_chans=1, embed_dim=48, spatial_dims=3
    patch_size = (2, 2, 2)
    in_chans = 1
    embed_dim = 48

    key = jax.random.PRNGKey(0)
    k_x, k_w, k_b, k_g, k_beta, k_x2 = jax.random.split(key, 6)

    # deterministic synthetic parameters (conv weight OIDHW)
    params = {
        "w": 0.1 * jax.random.normal(
            k_w, (embed_dim, in_chans) + patch_size, dtype=jnp.float32),
        "b": 0.1 * jax.random.normal(k_b, (embed_dim,), dtype=jnp.float32),
        "gamma": 1.0 + 0.05 * jax.random.normal(k_g, (embed_dim,), dtype=jnp.float32),
        "beta": 0.05 * jax.random.normal(k_beta, (embed_dim,), dtype=jnp.float32),
    }

    # --- test 1: divisible spatial dims, single full token tile ---
    B, D, H, W = 2, 8, 8, 8
    x = jax.random.normal(k_x, (B, in_chans, D, H, W), dtype=jnp.float32)
    fwd = jax.jit(functools.partial(patch_embed_forward, patch_size=patch_size))
    out = jax.block_until_ready(fwd(x, params))
    ref = _reference(x, params, patch_size)
    assert out.shape == (B, embed_dim, D // 2, H // 2, W // 2), out.shape
    assert jnp.allclose(out, ref, rtol=1e-4, atol=1e-4), "mismatch vs reference (test 1)"

    # --- test 2: odd depth (exercises spatial padding) + forced small token
    # tile (exercises the non-dividing boundary-tile path) ---
    x2 = jax.random.normal(k_x2, (1, in_chans, 11, 12, 12), dtype=jnp.float32)
    fwd2 = jax.jit(functools.partial(patch_embed_forward, patch_size=patch_size,
                                     max_tile_tokens=128))
    out2 = jax.block_until_ready(fwd2(x2, params))
    ref2 = _reference(x2, params, patch_size)
    assert out2.shape == (1, embed_dim, 6, 6, 6), out2.shape
    assert jnp.allclose(out2, ref2, rtol=1e-4, atol=1e-4), "mismatch vs reference (test 2)"

    print("KERNEL_OK")
</pallas_src>

<mosaic_0001>
module attributes {stable_mosaic.version = 11 : i64} {
  func.func @_patch_embed_kernel(%arg0: i32, %arg1: i32, %arg2: memref<1x8x64xf32, #tpu.memory_space<vmem>>, %arg3: memref<48x8xf32, #tpu.memory_space<vmem>>, %arg4: memref<48x1xf32, #tpu.memory_space<vmem>>, %arg5: memref<48x1xf32, #tpu.memory_space<vmem>>, %arg6: memref<48x1xf32, #tpu.memory_space<vmem>>, %arg7: memref<1x48x64xf32, #tpu.memory_space<vmem>>) attributes {dimension_semantics = [#tpu.dimension_semantics<parallel>, #tpu.dimension_semantics<parallel>], iteration_bounds = array<i64: 2, 1>, scalar_prefetch = 0 : i64, scratch_operands = 0 : i64, tpu.core_type = #tpu.core_type<tc>, window_params = [{transform_indices = @transform_0, window_bounds = array<i64: 1, 8, 64>}, {pipeline_mode = #tpu.pipeline_mode<synchronous>, transform_indices = @transform_1, window_bounds = array<i64: 48, 8>}, {pipeline_mode = #tpu.pipeline_mode<synchronous>, transform_indices = @transform_2, window_bounds = array<i64: 48, 1>}, {pipeline_mode = #tpu.pipeline_mode<synchronous>, transform_indices = @transform_3, window_bounds = array<i64: 48, 1>}, {pipeline_mode = #tpu.pipeline_mode<synchronous>, transform_indices = @transform_4, window_bounds = array<i64: 48, 1>}, {transform_indices = @transform_5, window_bounds = array<i64: 1, 48, 64>}]} {
    %c0 = arith.constant 0 : index
    %c0_0 = arith.constant 0 : index
    %c0_1 = arith.constant 0 : index
    %0 = vector.load %arg2[%c0, %c0_0, %c0_1] : memref<1x8x64xf32, #tpu.memory_space<vmem>>, vector<1x8x64xf32>
    %1 = vector.shape_cast %0 : vector<1x8x64xf32> to vector<8x64xf32>
    %c0_2 = arith.constant 0 : index
    %c0_3 = arith.constant 0 : index
    %2 = vector.load %arg3[%c0_2, %c0_3] : memref<48x8xf32, #tpu.memory_space<vmem>>, vector<48x8xf32>
    %cst = arith.constant dense<0.000000e+00> : vector<48x64xf32>
    %3 = tpu.matmul %2, %1, %cst {dimension_numbers = #tpu.dot_dimension_numbers<[1], [0], [0], [1], [0, 0, 1, 1], [], []>} : vector<48x8xf32>, vector<8x64xf32>, vector<48x64xf32> -> vector<48x64xf32>
    %c0_4 = arith.constant 0 : index
    %c0_5 = arith.constant 0 : index
    %4 = vector.load %arg4[%c0_4, %c0_5] : memref<48x1xf32, #tpu.memory_space<vmem>>, vector<48x1xf32>
    %5 = vector.broadcast %4 : vector<48x1xf32> to vector<48x64xf32>
    %6 = arith.addf %3, %5 : vector<48x64xf32>
    %cst_6 = arith.constant dense<0.000000e+00> : vector<64xf32>
    %7 = vector.multi_reduction <add>, %6, %cst_6 [0] : vector<48x64xf32> to vector<64xf32>
    %8 = vector.shape_cast %7 : vector<64xf32> to vector<1x64xf32>
    %9 = arith.mulf %6, %6 : vector<48x64xf32>
    %cst_7 = arith.constant dense<0.000000e+00> : vector<64xf32>
    %10 = vector.multi_reduction <add>, %9, %cst_7 [0] : vector<48x64xf32> to vector<64xf32>
    %11 = vector.shape_cast %10 : vector<64xf32> to vector<1x64xf32>
    %cst_8 = arith.constant 0.020833334 : f32
    %12 = vector.broadcast %cst_8 : f32 to vector<1x64xf32>
    %13 = arith.mulf %8, %12 : vector<1x64xf32>
    %cst_9 = arith.constant 0.020833334 : f32
    %14 = vector.broadcast %cst_9 : f32 to vector<1x64xf32>
    %15 = arith.mulf %11, %14 : vector<1x64xf32>
    %16 = arith.mulf %13, %13 : vector<1x64xf32>
    %17 = arith.subf %15, %16 : vector<1x64xf32>
    %cst_10 = arith.constant 0.000000e+00 : f32
    %18 = vector.broadcast %cst_10 : f32 to vector<1x64xf32>
    %19 = arith.maximumf %17, %18 : vector<1x64xf32>
    %cst_11 = arith.constant 9.99999974E-6 : f32
    %20 = vector.broadcast %cst_11 : f32 to vector<1x64xf32>
    %21 = arith.addf %19, %20 : vector<1x64xf32>
    %22 = math.rsqrt %21 : vector<1x64xf32>
    %23 = vector.broadcast %13 : vector<1x64xf32> to vector<48x64xf32>
    %24 = arith.subf %6, %23 : vector<48x64xf32>
    %25 = vector.broadcast %22 : vector<1x64xf32> to vector<48x64xf32>
    %26 = arith.mulf %24, %25 : vector<48x64xf32>
    %c0_12 = arith.constant 0 : index
    %c0_13 = arith.constant 0 : index
    %27 = vector.load %arg5[%c0_12, %c0_13] : memref<48x1xf32, #tpu.memory_space<vmem>>, vector<48x1xf32>
    %28 = vector.broadcast %27 : vector<48x1xf32> to vector<48x64xf32>
    %29 = arith.mulf %26, %28 : vector<48x64xf32>
    %c0_14 = arith.constant 0 : index
    %c0_15 = arith.constant 0 : index
    %30 = vector.load %arg6[%c0_14, %c0_15] : memref<48x1xf32, #tpu.memory_space<vmem>>, vector<48x1xf32>
    %31 = vector.broadcast %30 : vector<48x1xf32> to vector<48x64xf32>
    %32 = arith.addf %29, %31 : vector<48x64xf32>
    %c0_16 = arith.constant 0 : index
    %c0_17 = arith.constant 0 : index
    %c0_18 = arith.constant 0 : index
    %33 = vector.load %arg7[%c0_16, %c0_17, %c0_18] : memref<1x48x64xf32, #tpu.memory_space<vmem>>, vector<1x48x64xf32>
    %34 = vector.shape_cast %33 : vector<1x48x64xf32> to vector<48x64xf32>
    %35 = vector.shape_cast %32 : vector<48x64xf32> to vector<1x48x64xf32>
    tpu.vector_store %arg7[%c0_16, %c0_17, %c0_18], %35 {strides = array<i32>} : memref<1x48x64xf32, #tpu.memory_space<vmem>>, vector<1x48x64xf32>,
    return
  }
  func.func @transform_0(%arg0: i32, %arg1: i32) -> (i32, i32, i32) {
    %c0_i32 = arith.constant 0 : i32
    %c0_i32_0 = arith.constant 0 : i32
    return %arg0, %c0_i32, %arg1 : i32, i32, i32
  }
  func.func @transform_1(%arg0: i32, %arg1: i32) -> (i32, i32) {
    %c0_i32 = arith.constant 0 : i32
    %c0_i32_0 = arith.constant 0 : i32
    %c0_i32_1 = arith.constant 0 : i32
    return %c0_i32, %c0_i32_0 : i32, i32
  }
  func.func @transform_2(%arg0: i32, %arg1: i32) -> (i32, i32) {
    %c0_i32 = arith.constant 0 : i32
    %c0_i32_0 = arith.constant 0 : i32
    %c0_i32_1 = arith.constant 0 : i32
    return %c0_i32, %c0_i32_0 : i32, i32
  }
  func.func @transform_3(%arg0: i32, %arg1: i32) -> (i32, i32) {
    %c0_i32 = arith.constant 0 : i32
    %c0_i32_0 = arith.constant 0 : i32
    %c0_i32_1 = arith.constant 0 : i32
    return %c0_i32, %c0_i32_0 : i32, i32
  }
  func.func @transform_4(%arg0: i32, %arg1: i32) -> (i32, i32) {
    %c0_i32 = arith.constant 0 : i32
    %c0_i32_0 = arith.constant 0 : i32
    %c0_i32_1 = arith.constant 0 : i32
    return %c0_i32, %c0_i32_0 : i32, i32
  }
  func.func @transform_5(%arg0: i32, %arg1: i32) -> (i32, i32, i32) {
    %c0_i32 = arith.constant 0 : i32
    %c0_i32_0 = arith.constant 0 : i32
    return %arg0, %c0_i32, %arg1 : i32, i32, i32
  }
}

</mosaic_0001>

<llo_original>
// kernel: patch_embed_forward.1
$region0: #{patch_embed_forward.1}
  #allocation0 [shape = 'u32[]', space=smem, size = 0x4, offset = 0x4, fixed_abs, tag = 'smem constant byte address 0x4 - core index']
  #allocation1 [shape = 'u32[144,128]{1,0:T(1,128)}', space=vmem, size = 0x12000, scoped, tag = 'internal scratch']
  %s0 = inlined_call_operand.vmem [shape: f32[2,8,64], index: 0, kind: input, shape index: {}]
  %s1 = inlined_call_operand.vmem [shape: f32[48,8], index: 1, kind: input, shape index: {}]
  %s2 = inlined_call_operand.vmem [shape: f32[48,1], index: 2, kind: input, shape index: {}]
  %s3 = inlined_call_operand.vmem [shape: f32[48,1], index: 3, kind: input, shape index: {}]
  %s4 = inlined_call_operand.vmem [shape: f32[48,1], index: 4, kind: input, shape index: {}]
  %s5 = inlined_call_operand.vmem [shape: f32[2,48,64], index: 5, kind: output, shape index: {}]
  %s6 = sld [smem:[#allocation0]]
  $region53: #{patch_embed_forward.1} parent=0
    _
  %s8 = ssub.s32 1, %s6
  %s9 = scalar_select 0, %s8, %s6
  loop: start=0, step=1, limit=4
  $region2: #{patch_embed_forward.1} parent=0 // loop_pre_header
    _
  $region3: #{patch_embed_forward.1} parent=0 // loop_header
    %s11 = sphi 0, %s15
    %p12 = scmp.ge.s32.totalorder %s11, 4
    %s18 = sphi 0, %s30
    %s19 = sphi 0, %s26
    %s20 = sphi 0, %s18
    %s21 = sphi 0, %s19
    %s22 = sphi 0, %s20
    %s23 = sphi 0, %s21
    %s35 = sphi 0, %s37
    %s38 = sphi 0, %s35
    %s39 = sphi 0, %s38
    %s55 = sphi 0, %s39
    %s59 = sphi 0, %s59
    %s61 = sphi 0, %s59
    %s62 = sphi 0, %s61
    %s76 = sphi 0, %s62
    %s80 = sphi 0, %s80
    %s82 = sphi 0, %s80
    %s83 = sphi 0, %s82
    %s97 = sphi 0, %s83
    %s101 = sphi 0, %s101
    %s103 = sphi 0, %s101
    %s104 = sphi 0, %s103
    %s118 = sphi 0, %s104
    %s122 = sphi 0, %s122
    %s124 = sphi 0, %s122
    %s125 = sphi 0, %s124
    %s139 = sphi 0, %s125
    %s147 = sphi 0, %s149
    %s150 = sphi 0, %s147
    %s151 = sphi 0, %s150
    %s167 = sphi 0, %s151
  $region4: #{patch_embed_forward.1} parent=0 // loop_header_branch
    %14 = sbr.rel (%p12) target = $region8
  $region5: #{patch_embed_forward.1} parent=0 // loop_body
    %s16 = ssub.s32 %s11, 1
    %s17 = ssub.s32 %s11, 2
    %s24 = sadd.s32 1, %s19
    %p25 = scmp.ge.s32.totalorder %s24, 1
    %s26 = scalar_select %p25, 0, %s24
    %s27 = sadd.s32 1, %s18
    %s28 = scalar_select %p25, %s27, %s18
    %p29 = scmp.ge.s32.totalorder %s28, 2
    %s30 = scalar_select %p29, 0, %s28
    %s31 = ssub.s32 %s18, %s30
    %s32 = ssub.s32 %s19, %s26
    %s33 = sor.u32 %s31, %s32
    %p34 = scmp.eq.s32.totalorder %s33, 0
    %s36 = sadd.s32 %s35, 1
    %s37 = scalar_select %p34, %s35, %s36
    %p40 = pneg %p34
    %p41 = scmp.eq.s32.totalorder %s11, 1
    %p42 = por %p40, %p41
    %p43 = scmp.ne.s32.totalorder %s35, %s38
    %p44 = scmp.eq.s32.totalorder %s11, 0
    %p45 = por %p43, %p44
    %p46 = scmp.ne.s32.totalorder %s35, %s38
    %p47 = scmp.eq.s32.totalorder %s16, 1
    %p48 = por %p46, %p47
    %p49 = scmp.ne.s32.totalorder %s38, %s39
    %p50 = scmp.eq.s32.totalorder %s16, 0
    %p51 = por %p49, %p50
    %p52 = scmp.ne.s32.totalorder %s38, %s39
    %p53 = scmp.eq.s32.totalorder %s17, 1
    %p54 = por %p52, %p53
    %p56 = scmp.ne.s32.totalorder %s39, %s55
    %p57 = scmp.eq.s32.totalorder %s17, 0
    %p58 = por %p56, %p57
    %s60 = sadd.s32 %s59, 1
    %p63 = scmp.eq.s32.totalorder %s11, 1
    %p64 = scmp.ne.s32.totalorder %s59, %s61
    %p65 = scmp.eq.s32.totalorder %s11, 0
    %p66 = por %p64, %p65
    %p67 = scmp.ne.s32.totalorder %s59, %s61
    %p68 = scmp.eq.s32.totalorder %s16, 1
    %p69 = por %p67, %p68
    %p70 = scmp.ne.s32.totalorder %s61, %s62
    %p71 = scmp.eq.s32.totalorder %s16, 0
    %p72 = por %p70, %p71
    %p73 = scmp.ne.s32.totalorder %s61, %s62
    %p74 = scmp.eq.s32.totalorder %s17, 1
    %p75 = por %p73, %p74
    %p77 = scmp.ne.s32.totalorder %s62, %s76
    %p78 = scmp.eq.s32.totalorder %s17, 0
    %p79 = por %p77, %p78
    %s81 = sadd.s32 %s80, 1
    %p84 = scmp.eq.s32.totalorder %s11, 1
    %p85 = scmp.ne.s32.totalorder %s80, %s82
    %p86 = scmp.eq.s32.totalorder %s11, 0
    %p87 = por %p85, %p86
    %p88 = scmp.ne.s32.totalorder %s80, %s82
    %p89 = scmp.eq.s32.totalorder %s16, 1
    %p90 = por %p88, %p89
    %p91 = scmp.ne.s32.totalorder %s82, %s83
    %p92 = scmp.eq.s32.totalorder %s16, 0
    %p93 = por %p91, %p92
    %p94 = scmp.ne.s32.totalorder %s82, %s83
    %p95 = scmp.eq.s32.totalorder %s17, 1
    %p96 = por %p94, %p95
    %p98 = scmp.ne.s32.totalorder %s83, %s97
    %p99 = scmp.eq.s32.totalorder %s17, 0
    %p100 = por %p98, %p99
    %s102 = sadd.s32 %s101, 1
    %p105 = scmp.eq.s32.totalorder %s11, 1
    %p106 = scmp.ne.s32.totalorder %s101, %s103
    %p107 = scmp.eq.s32.totalorder %s11, 0
    %p108 = por %p106, %p107
    %p109 = scmp.ne.s32.totalorder %s101, %s103
    %p110 = scmp.eq.s32.totalorder %s16, 1
    %p111 = por %p109, %p110
    %p112 = scmp.ne.s32.totalorder %s103, %s104
    %p113 = scmp.eq.s32.totalorder %s16, 0
    %p114 = por %p112, %p113
    %p115 = scmp.ne.s32.totalorder %s103, %s104
    %p116 = scmp.eq.s32.totalorder %s17, 1
    %p117 = por %p115, %p116
    %p119 = scmp.ne.s32.totalorder %s104, %s118
    %p120 = scmp.eq.s32.totalorder %s17, 0
    %p121 = por %p119, %p120
    %s123 = sadd.s32 %s122, 1
    %p126 = scmp.eq.s32.totalorder %s11, 1
    %p127 = scmp.ne.s32.totalorder %s122, %s124
    %p128 = scmp.eq.s32.totalorder %s11, 0
    %p129 = por %p127, %p128
    %p130 = scmp.ne.s32.totalorder %s122, %s124
    %p131 = scmp.eq.s32.totalorder %s16, 1
    %p132 = por %p130, %p131
    %p133 = scmp.ne.s32.totalorder %s124, %s125
    %p134 = scmp.eq.s32.totalorder %s16, 0
    %p135 = por %p133, %p134
    %p136 = scmp.ne.s32.totalorder %s124, %s125
    %p137 = scmp.eq.s32.totalorder %s17, 1
    %p138 = por %p136, %p137
    %p140 = scmp.ne.s32.totalorder %s125, %s139
    %p141 = scmp.eq.s32.totalorder %s17, 0
    %p142 = por %p140, %p141
    %s143 = ssub.s32 %s18, %s30
    %s144 = ssub.s32 %s19, %s26
    %s145 = sor.u32 %s143, %s144
    %p146 = scmp.eq.s32.totalorder %s145, 0
    %s148 = sadd.s32 %s147, 1
    %s149 = scalar_select %p146, %s147, %s148
    %p152 = pneg %p146
    %p153 = scmp.eq.s32.totalorder %s11, 1
    %p154 = por %p152, %p153
    %p155 = scmp.ne.s32.totalorder %s147, %s150
    %p156 = scmp.eq.s32.totalorder %s11, 0
    %p157 = por %p155, %p156
    %p158 = scmp.ne.s32.totalorder %s147, %s150
    %p159 = scmp.eq.s32.totalorder %s16, 1
    %p160 = por %p158, %p159
    %p161 = scmp.ne.s32.totalorder %s150, %s151
    %p162 = scmp.eq.s32.totalorder %s16, 0
    %p163 = por %p161, %p162
    %p164 = scmp.ne.s32.totalorder %s150, %s151
    %p165 = scmp.eq.s32.totalorder %s17, 1
    %p166 = por %p164, %p165
    %p168 = scmp.ne.s32.totalorder %s151, %s167
    %p169 = scmp.eq.s32.totalorder %s17, 0
    %p170 = por %p168, %p169
    %p171 = scmp.le.s32.totalorder 1, %s11
    %p172 = scmp.lt.s32.totalorder %s11, 3
    %p173 = pnand %p171, %p172
    %p174 = pneg %p173
    // Predicated region
    $region9: #{patch_embed_forward.1} parent=5 // pred_check
      _
    $region10: #{patch_embed_forward.1} parent=5 // pred_check_branch
      %176 = sbr.rel (%p173) target = $region12
    $region11: #{patch_embed_forward.1} parent=5 // pred_region
      %s177 = ssub.s32 %s11, 1
      // Predicated region
      $region13: #{patch_embed_forward.1} parent=11 // pred_check
        %p178 = pneg %p72
      $region14: #{patch_embed_forward.1} parent=11 // pred_check_branch
        %180 = sbr.rel (%p178) target = $region16
      $region15: #{patch_embed_forward.1} parent=11 // pred_region
        _
      $region16: #{patch_embed_forward.1} parent=11 // pred_fallthru
        _
      // Predicated region
      $region17: #{patch_embed_forward.1} parent=11 // pred_check
        %p181 = pneg %p93
      $region18: #{patch_embed_forward.1} parent=11 // pred_check_branch
        %183 = sbr.rel (%p181) target = $region20
      $region19: #{patch_embed_forward.1} parent=11 // pred_region
        _
      $region20: #{patch_embed_forward.1} parent=11 // pred_fallthru
        _
      // Predicated region
      $region21: #{patch_embed_forward.1} parent=11 // pred_check
        %p184 = pneg %p114
      $region22: #{patch_embed_forward.1} parent=11 // pred_check_branch
        %186 = sbr.rel (%p184) target = $region24
      $region23: #{patch_embed_forward.1} parent=11 // pred_region
        _
      $region24: #{patch_embed_forward.1} parent=11 // pred_fallthru
        _
      // Predicated region
      $region25: #{patch_embed_forward.1} parent=11 // pred_check
        %p187 = pneg %p135
      $region26: #{patch_embed_forward.1} parent=11 // pred_check_branch
        %189 = sbr.rel (%p187) target = $region28
      $region27: #{patch_embed_forward.1} parent=11 // pred_region
        _
      $region28: #{patch_embed_forward.1} parent=11 // pred_fallthru
        _
    $region12: #{patch_embed_forward.1} parent=5 // pred_fallthru
      _
    %p190 = scmp.lt.s32.totalorder %s11, 2
    // Predicated region
    $region29: #{patch_embed_forward.1} parent=5 // pred_check
      %p191 = pneg %p190
    $region30: #{patch_embed_forward.1} parent=5 // pred_check_branch
      %193 = sbr.rel (%p191) target = $region32
    $region31: #{patch_embed_forward.1} parent=5 // pred_region
      // Predicated region
      $region33: #{patch_embed_forward.1} parent=31 // pred_check
        %p194 = pneg %p45
      $region34: #{patch_embed_forward.1} parent=31 // pred_check_branch
        %196 = sbr.rel (%p194) target = $region36
      $region35: #{patch_embed_forward.1} parent=31 // pred_region
        %p197 = scmp.lt.s32.totalorder %s18, 1
        %s198 = scalar_select %p197, %s18, 1
        %p199 = scmp.lt.s32.totalorder %s19, 0
        %s200 = scalar_select %p199, %s19, 0
        %s201 = sadd.s32 %s200, %s198
        %s202 = smul.addr %s201, 8
        %s203 = scalar_lea.vmem %s0, %s202
      $region36: #{patch_embed_forward.1} parent=31 // pred_fallthru
        _
    $region32: #{patch_embed_forward.1} parent=5 // pred_fallthru
      _
    %p204 = scmp.le.s32.totalorder 1, %s11
    %p205 = scmp.lt.s32.totalorder %s11, 3
    %p206 = pnand %p204, %p205
    %p207 = pneg %p206
    // Predicated region
    $region37: #{patch_embed_forward.1} parent=5 // pred_check
      _
    $region38: #{patch_embed_forward.1} parent=5 // pred_check_branch
      %209 = sbr.rel (%p206) target = $region40
    $region39: #{patch_embed_forward.1} parent=5 // pred_region
      %s210 = ssub.s32 %s11, 1
      %p211 = scmp.lt.s32.totalorder %s20, 1
      %s212 = scalar_select %p211, %s20, 1
      %p213 = scmp.lt.s32.totalorder %s21, 0
      %s214 = scalar_select %p213, %s21, 0
      %s215 = sadd.s32 %s214, %s212
      %s216 = smul.addr %s215, 8
      %s217 = scalar_lea.vmem %s0, %s216
      %p218 = pneg %p51
      %p219 = pneg %p48
      %p220 = pneg %p72
      %p221 = pneg %p69
      %p222 = pneg %p93
      %p223 = pneg %p90
      %p224 = pneg %p114
      %p225 = pneg %p111
      %p226 = pneg %p135
      %p227 = pneg %p132
      %p228 = pneg %p163
      %p229 = pneg %p160
      %p230 = scmp.lt.s32.totalorder %s20, 1
      %s231 = scalar_select %p230, %s20, 1
      %p232 = scmp.lt.s32.totalorder %s21, 0
      %s233 = scalar_select %p232, %s21, 0
      %s234 = smul.addr %s231, 6
      %s235 = sadd.s32 %s233, %s234
      %s236 = smul.addr %s235, 8
      %s237 = scalar_lea.vmem %s5, %s236
      %p238 = scmp.lt.s32.totalorder %s20, 1
      %s239 = scalar_select %p238, %s20, 1
      %p240 = scmp.lt.s32.totalorder %s21, 0
      %s241 = scalar_select %p240, %s21, 0
      %s242 = sadd.s32 %s241, %s239
      %s243 = smul.addr %s242, 8
      %s244 = scalar_lea.vmem %s0, %s243
      %p245 = scmp.lt.s32.totalorder %s20, 1
      %s246 = scalar_select %p245, %s20, 1
      %p247 = scmp.lt.s32.totalorder %s21, 0
      %s248 = scalar_select %p247, %s21, 0
      %s249 = smul.addr %s246, 6
      %s250 = sadd.s32 %s248, %s249
      %s251 = smul.addr %s250, 8
      %s252 = scalar_lea.vmem %s5, %s251
      %v253 = vld [vmem:[%s244] sm:$0xff]
      %v254 = vld [vmem:[%s1] sm:$0xff]
      %v255 = vld [vmem:[%s1 + $0x8] sm:$0xff]
      %v256 = vld [vmem:[%s1 + $0x10] sm:$0xff]
      %v257 = vld [vmem:[%s1 + $0x18] sm:$0xff]
      %v258 = vld [vmem:[%s1 + $0x20] sm:$0xff]
      %v259 = vld [vmem:[%s1 + $0x28] sm:$0xff]
      %v260 = vld [vmem:[%s2] sm:$0xff]
      %v261 = vld [vmem:[%s2 + $0x8] sm:$0xff]
      %v262 = vld [vmem:[%s2 + $0x10] sm:$0xff]
      %v263 = vld [vmem:[%s2 + $0x18] sm:$0xff]
      %v264 = vld [vmem:[%s2 + $0x20] sm:$0xff]
      %v265 = vld [vmem:[%s2 + $0x28] sm:$0xff]
      %267 = vset.pattern.permute.xlu0 0
      %268 = vperm.xlu0 %267, %v260
      %v269 = vpop.permute.xlu0 %268
      %272 = vset.pattern.permute.xlu0 0
      %273 = vperm.xlu0 %272, %v261
      %v274 = vpop.permute.xlu0 %273
      %277 = vset.pattern.permute.xlu0 0
      %278 = vperm.xlu0 %277, %v262
      %v279 = vpop.permute.xlu0 %278
      %282 = vset.pattern.permute.xlu0 0
      %283 = vperm.xlu0 %282, %v263
      %v284 = vpop.permute.xlu0 %283
      %287 = vset.pattern.permute.xlu0 0
      %288 = vperm.xlu0 %287, %v264
      %v289 = vpop.permute.xlu0 %288
      %292 = vset.pattern.permute.xlu0 0
      %293 = vperm.xlu0 %292, %v265
      %v294 = vpop.permute.xlu0 %293
      %vm296 = vcmask 64512
      %v298 = vsel %vm296, %v254, 0
      %v301 = vsel %vm296, %v255, 0
      %v304 = vsel %vm296, %v256, 0
      %v307 = vsel %vm296, %v257, 0
      %v310 = vsel %vm296, %v258, 0
      %v313 = vsel %vm296, %v259, 0
      %315 = vmatprep.subr.mxu0 0.0
      %316 = vmatpush1.msra.mxu0 %v253
      %317 = vmatprep.subr.mxu0 0.0
      %318 = vmatpush1.msra.mxu0 0.0
      %319 = vmatprep.subr.mxu0 0.0
      %320 = vmatpush1.msra.mxu0 0.0
      %321 = vmatprep.subr.mxu0 0.0
      %322 = vmatpush1.msra.mxu0 0.0
      %323 = vmatprep.subr.mxu0 0.0
      %324 = vmatpush1.msra.mxu0 0.0
      %325 = vmatprep.subr.mxu0 0.0
      %326 = vmatpush1.msra.mxu0 0.0
      %327 = vmatprep.subr.mxu0 0.0
      %328 = vmatpush1.msra.mxu0 0.0
      %329 = vmatprep.subr.mxu0 0.0
      %330 = vmatpush1.msra.mxu0 0.0
      %331 = vmatprep.subr.mxu0 0.0
      %332 = vmatpush1.msra.mxu0 0.0
      %333 = vmatprep.subr.mxu0 0.0
      %334 = vmatpush1.msra.mxu0 0.0
      %335 = vmatprep.subr.mxu0 0.0
      %336 = vmatpush1.msra.mxu0 0.0
      %337 = vmatprep.subr.mxu0 0.0
      %338 = vmatpush1.msra.mxu0 0.0
      %339 = vmatprep.subr.mxu0 0.0
      %340 = vmatpush1.msra.mxu0 0.0
      %341 = vmatprep.subr.mxu0 0.0
      %342 = vmatpush1.msra.mxu0 0.0
      %343 = vmatprep.subr.mxu0 0.0
      %344 = vmatpush1.msra.mxu0 0.0
      %345 = vmatprep.subr.mxu0 0.0
      %346 = vmatpush1.msra.mxu0 0.0
      %347 = vmatprep.subr.mxu0 0.0
      %348 = vmatpush1.msra.mxu0 0.0
      %349 = vmatprep.subr.mxu0 0.0
      %350 = vmatpush1.msra.mxu0 0.0
      %351 = vmatprep.subr.mxu0 0.0
      %352 = vmatpush1.msra.mxu0 0.0
      %353 = vmatprep.subr.mxu0 0.0
      %354 = vmatpush1.msra.mxu0 0.0
      %355 = vmatprep.subr.mxu0 0.0
      %356 = vmatpush1.msra.mxu0 0.0
      %357 = vmatprep.subr.mxu0 0.0
      %358 = vmatpush1.msra.mxu0 0.0
      %359 = vmatprep.subr.mxu0 0.0
      %360 = vmatpush1.msra.mxu0 0.0
      %361 = vmatprep.subr.mxu0 0.0
      %362 = vmatpush1.msra.mxu0 0.0
      %363 = vmatprep.subr.mxu0 0.0
      %364 = vmatpush1.msra.mxu0 0.0
      %365 = vmatprep.subr.mxu0 0.0
      %366 = vmatpush1.msra.mxu0 0.0
      %367 = vmatprep.subr.mxu0 0.0
      %368 = vmatpush1.msra.mxu0 0.0
      %369 = vmatprep.subr.mxu0 0.0
      %370 = vmatpush1.msra.mxu0 0.0
      %371 = vmatprep.subr.mxu0 0.0
      %372 = vmatpush1.msra.mxu0 0.0
      %373 = vmatprep.subr.mxu0 0.0
      %374 = vmatpush1.msra.mxu0 0.0
      %375 = vmatprep.subr.mxu0 0.0
      %376 = vmatpush1.msra.mxu0 0.0
      %377 = vmatprep.subr.mxu0 0.0
      %378 = vmatpush1.msra.mxu0 0.0
      %379 = vmatprep.mubr.f32.mxu0 0.0
      %380 = vmatmul.mubr.f32.gmra.mrb[0].mxu0 %v298
      %v381 = vpop.f32.mrb[0].mxu0
      %v382 = vadd.f32 %v269, %v381
      %v383 = vpop.f32.mrb[0].mxu0
      %384 = vmatprep.mubr.f32.mxu0 0.0
      %385 = vmatmul.mubr.f32.gmra.mrb[0].mxu0 %v301
      %v386 = vpop.f32.mrb[0].mxu0
      %v387 = vadd.f32 %v274, %v386
      %v388 = vpop.f32.mrb[0].mxu0
      %389 = vmatprep.mubr.f32.mxu0 0.0
      %390 = vmatmul.mubr.f32.gmra.mrb[0].mxu0 %v304
      %v391 = vpop.f32.mrb[0].mxu0
      %v392 = vadd.f32 %v279, %v391
      %v393 = vpop.f32.mrb[0].mxu0
      %394 = vmatprep.mubr.f32.mxu0 0.0
      %395 = vmatmul.mubr.f32.gmra.mrb[0].mxu0 %v307
      %v396 = vpop.f32.mrb[0].mxu0
      %v397 = vadd.f32 %v284, %v396
      %v398 = vpop.f32.mrb[0].mxu0
      %399 = vmatprep.mubr.f32.mxu0 0.0
      %400 = vmatmul.mubr.f32.gmra.mrb[0].mxu0 %v310
      %v401 = vpop.f32.mrb[0].mxu0
      %v402 = vadd.f32 %v289, %v401
      %v403 = vpop.f32.mrb[0].mxu0
      %404 = vmatprep.mubr.f32.mxu0 0.0
      %405 = vmatmul.mubr.f32.gmra.mrb[0].mxu0 %v313
      %v406 = vpop.f32.mrb[0].mxu0
      %v407 = vadd.f32 %v294, %v406
      %v408 = vpop.f32.mrb[0].mxu0
      %409 = vdwg.mxu0
      %vm410 = vcmask 523264
      %v411 = vsel %vm410, %v382, 0.0
      %v412 = vsel %vm410, %v387, 0.0
      %v413 = vadd.f32 %v411, %v412
      %v414 = vsel %vm410, %v392, 0.0
      %v415 = vadd.f32 %v413, %v414
      %v416 = vsel %vm410, %v397, 0.0
      %v417 = vadd.f32 %v415, %v416
      %v418 = vsel %vm410, %v402, 0.0
      %v419 = vadd.f32 %v417, %v418
      %v420 = vsel %vm410, %v407, 0.0
      %v421 = vadd.f32 %v419, %v420
      %v422 = vrot.slane %v421, 4
      %v423 = vadd.f32 %v421, %v422
      %v424 = vrot.slane %v423, 2
      %v425 = vadd.f32 %v423, %v424
      %v426 = vrot.slane %v425, 1
      %v427 = vadd.f32 %v425, %v426
      %v428 = vmul.f32 %v382, %v382
      %v429 = vmul.f32 %v387, %v387
      %v430 = vmul.f32 %v392, %v392
      %v431 = vmul.f32 %v397, %v397
      %v432 = vmul.f32 %v402, %v402
      %v433 = vmul.f32 %v407, %v407
      %v434 = vsel %vm410, %v428, 0.0
      %v435 = vsel %vm410, %v429, 0.0
      %v436 = vadd.f32 %v434, %v435
      %v437 = vsel %vm410, %v430, 0.0
      %v438 = vadd.f32 %v436, %v437
      %v439 = vsel %vm410, %v431, 0.0
      %v440 = vadd.f32 %v438, %v439
      %v441 = vsel %vm410, %v432, 0.0
      %v442 = vadd.f32 %v440, %v441
      %v443 = vsel %vm410, %v433, 0.0
      %v444 = vadd.f32 %v442, %v443
      %v445 = vrot.slane %v444, 4
      %v446 = vadd.f32 %v444, %v445
      %v447 = vrot.slane %v446, 2
      %v448 = vadd.f32 %v446, %v447
      %v449 = vrot.slane %v448, 1
      %v450 = vadd.f32 %v448, %v449
      %v451 = vmul.f32 %v427, 0.020833334
      %v452 = vmul.f32 %v450, 0.020833334
      %v453 = vmul.f32 %v451, %v451
      %v454 = vsub.f32 %v452, %v453
      %v455 = vmax.f32 %v454, 0.0
      %v456 = vadd.f32 %v455, 1e-05
      %v457 = vrsqrt.pop %v456
      %v458 = vsub.f32 %v382, %v451
      %v459 = vsub.f32 %v387, %v451
      %v460 = vsub.f32 %v392, %v451
      %v461 = vsub.f32 %v397, %v451
      %v462 = vsub.f32 %v402, %v451
      %v463 = vsub.f32 %v407, %v451
      %v464 = vmul.f32 %v458, %v457
      %v465 = vmul.f32 %v459, %v457
      %v466 = vmul.f32 %v460, %v457
      %v467 = vmul.f32 %v461, %v457
      %v468 = vmul.f32 %v462, %v457
      %v469 = vmul.f32 %v463, %v457
      %v470 = vld [vmem:[%s3] sm:$0xff]
      %v471 = vld [vmem:[%s3 + $0x8] sm:$0xff]
      %v472 = vld [vmem:[%s3 + $0x10] sm:$0xff]
      %v473 = vld [vmem:[%s3 + $0x18] sm:$0xff]
      %v474 = vld [vmem:[%s3 + $0x20] sm:$0xff]
      %v475 = vld [vmem:[%s3 + $0x28] sm:$0xff]
      %477 = vset.pattern.permute.xlu0 0
      %478 = vperm.xlu0 %477, %v470
      %v479 = vpop.permute.xlu0 %478
      %482 = vset.pattern.permute.xlu0 0
      %483 = vperm.xlu0 %482, %v471
      %v484 = vpop.permute.xlu0 %483
      %487 = vset.pattern.permute.xlu0 0
      %488 = vperm.xlu0 %487, %v472
      %v489 = vpop.permute.xlu0 %488
      %492 = vset.pattern.permute.xlu0 0
      %493 = vperm.xlu0 %492, %v473
      %v494 = vpop.permute.xlu0 %493
      %497 = vset.pattern.permute.xlu0 0
      %498 = vperm.xlu0 %497, %v474
      %v499 = vpop.permute.xlu0 %498
      %502 = vset.pattern.permute.xlu0 0
      %503 = vperm.xlu0 %502, %v475
      %v504 = vpop.permute.xlu0 %503
      %v506 = vmul.f32 %v464, %v479
      %v507 = vmul.f32 %v465, %v484
      %v508 = vmul.f32 %v466, %v489
      %v509 = vmul.f32 %v467, %v494
      %v510 = vmul.f32 %v468, %v499
      %v511 = vmul.f32 %v469, %v504
      %v512 = vld [vmem:[%s4] sm:$0xff]
      %v513 = vld [vmem:[%s4 + $0x8] sm:$0xff]
      %v514 = vld [vmem:[%s4 + $0x10] sm:$0xff]
      %v515 = vld [vmem:[%s4 + $0x18] sm:$0xff]
      %v516 = vld [vmem:[%s4 + $0x20] sm:$0xff]
      %v517 = vld [vmem:[%s4 + $0x28] sm:$0xff]
      %519 = vset.pattern.permute.xlu0 0
      %520 = vperm.xlu0 %519, %v512
      %v521 = vpop.permute.xlu0 %520
      %524 = vset.pattern.permute.xlu0 0
      %525 = vperm.xlu0 %524, %v513
      %v526 = vpop.permute.xlu0 %525
      %529 = vset.pattern.permute.xlu0 0
      %530 = vperm.xlu0 %529, %v514
      %v531 = vpop.permute.xlu0 %530
      %534 = vset.pattern.permute.xlu0 0
      %535 = vperm.xlu0 %534, %v515
      %v536 = vpop.permute.xlu0 %535
      %539 = vset.pattern.permute.xlu0 0
      %540 = vperm.xlu0 %539, %v516
      %v541 = vpop.permute.xlu0 %540
      %544 = vset.pattern.permute.xlu0 0
      %545 = vperm.xlu0 %544, %v517
      %v546 = vpop.permute.xlu0 %545
      %v548 = vadd.f32 %v506, %v521
      %v549 = vadd.f32 %v507, %v526
      %v550 = vadd.f32 %v508, %v531
      %v551 = vadd.f32 %v509, %v536
      %v552 = vadd.f32 %v510, %v541
      %v553 = vadd.f32 %v511, %v546
      %554 = vst.msk [vmem:[%s252] sm:$0xff] %vm410, %v548
      %555 = vst.msk [vmem:[%s252 + $0x8] sm:$0xff] %vm410, %v549
      %556 = vst.msk [vmem:[%s252 + $0x10] sm:$0xff] %vm410, %v550
      %557 = vst.msk [vmem:[%s252 + $0x18] sm:$0xff] %vm410, %v551
      %558 = vst.msk [vmem:[%s252 + $0x20] sm:$0xff] %vm410, %v552
      %559 = vst.msk [vmem:[%s252 + $0x28] sm:$0xff] %vm410, %v553
      %p560 = scmp.lt.s32.totalorder %s20, 1
      %s561 = scalar_select %p560, %s20, 1
      %p562 = scmp.lt.s32.totalorder %s21, 0
      %s563 = scalar_select %p562, %s21, 0
      %s564 = smul.addr %s561, 6
      %s565 = sadd.s32 %s563, %s564
      %s566 = smul.addr %s565, 8
      %s567 = scalar_lea.vmem %s5, %s566
      // Predicated region
      $region41: #{patch_embed_forward.1} parent=39 // pred_check
        %p568 = pneg %p160
      $region42: #{patch_embed_forward.1} parent=39 // pred_check_branch
        %570 = sbr.rel (%p568) target = $region44
      $region43: #{patch_embed_forward.1} parent=39 // pred_region
        _
      $region44: #{patch_embed_forward.1} parent=39 // pred_fallthru
        _
    $region40: #{patch_embed_forward.1} parent=5 // pred_fallthru
      _
    %p571 = scmp.le.s32.totalorder 2, %s11
    // Predicated region
    $region45: #{patch_embed_forward.1} parent=5 // pred_check
      %p572 = pneg %p571
    $region46: #{patch_embed_forward.1} parent=5 // pred_check_branch
      %574 = sbr.rel (%p572) target = $region48
    $region47: #{patch_embed_forward.1} parent=5 // pred_region
      %s575 = ssub.s32 %s11, 2
      // Predicated region
      $region49: #{patch_embed_forward.1} parent=47 // pred_check
        %p576 = pneg %p166
      $region50: #{patch_embed_forward.1} parent=47 // pred_check_branch
        %578 = sbr.rel (%p576) target = $region52
      $region51: #{patch_embed_forward.1} parent=47 // pred_region
        %p579 = scmp.lt.s32.totalorder %s22, 1
        %s580 = scalar_select %p579, %s22, 1
        %p581 = scmp.lt.s32.totalorder %s23, 0
        %s582 = scalar_select %p581, %s23, 0
        %s583 = smul.addr %s580, 6
        %s584 = sadd.s32 %s582, %s583
        %s585 = smul.addr %s584, 8
        %s586 = scalar_lea.vmem %s5, %s585
      $region52: #{patch_embed_forward.1} parent=47 // pred_fallthru
        _
    $region48: #{patch_embed_forward.1} parent=5 // pred_fallthru
      _
  $region6: #{patch_embed_forward.1} parent=0 // loop_footer
    %s15 = sadd.s32 1, %s11
  $region7: #{patch_embed_forward.1} parent=0 // loop_footer_branch
    %10 = sbr.rel target = $region3
  $region8: #{patch_embed_forward.1} parent=0 // loop_exit
    _

</llo_original>
